<compile_context>
chip_gen: v5e
topology: v5e:2x2
jax: 0.10.0
libtpu: 0.0.40
codegen_flags: <defaults>
</compile_context>

<pallas_src>
import jax
import jax.numpy as jnp
from jax.experimental import pallas as pl
from jax.experimental.pallas import tpu as pltpu

NEG_SLOPE = 0.01   # torch.nn.LeakyReLU default negative_slope
LANE = 128         # lane width: padded output feature axis


def _leaky_relu(x):
    return jnp.where(x > 0, x, NEG_SLOPE * x)


def _round_up(n, m):
    return ((n + m - 1) // m) * m


def actor_kernel(x_ref, w1_ref, b1_ref, w2_ref, b2_ref, w3_ref, b3_ref, o_ref):
    """One batch tile: 3 chained matmuls + activations, all resident in VMEM.

    Weights are (in, out) bf16; activations cast to bf16 only at the MXU inputs,
    accumulation + epilogue math in fp32. Final layer is zero-padded to 128 output
    lanes so the store is a full-width (lane-dense) vst.
    """
    x = x_ref[...]  # (TB, 16) fp32

    # Linear(16 -> 32) + LeakyReLU     (input net)
    h = jnp.dot(x.astype(jnp.bfloat16), w1_ref[...],
                preferred_element_type=jnp.float32) + b1_ref[...]
    h = _leaky_relu(h)

    # torch.cat([h], dim=1) with a single input net is the identity.

    # Linear(32 -> 32) + LeakyReLU     (output net, layer 1)
    h = jnp.dot(h.astype(jnp.bfloat16), w2_ref[...],
                preferred_element_type=jnp.float32) + b2_ref[...]
    h = _leaky_relu(h)

    # Linear(32 -> 4, zero-padded to 128) + Tanh   (output net, layer 2)
    h = jnp.dot(h.astype(jnp.bfloat16), w3_ref[...],
                preferred_element_type=jnp.float32) + b3_ref[...]
    o_ref[...] = jnp.tanh(h)   # padded lanes: tanh(0) = 0, sliced off in the wrapper


def actor_forward(x, params, *, block_b=512):
    """x: (batch, state_dim) fp32; params in torch layout (W:(out,in), b:(out,))."""
    w1, b1, w2, b2, w3, b3 = params
    batch, state_dim = x.shape
    hidden = w1.shape[0]
    act_dim = w3.shape[0]

    # --- one-time parameter plumbing (outside the hot loop) --------------------
    # Pre-transpose to (in, out) and cast to bf16; pad the final layer to 128
    # output lanes for lane-dense stores.
    w1t = w1.T.astype(jnp.bfloat16)                                   # (16, 32)
    w2t = w2.T.astype(jnp.bfloat16)                                   # (32, 32)
    w3t = jnp.zeros((hidden, LANE), jnp.bfloat16).at[:, :act_dim].set(
        w3.T.astype(jnp.bfloat16))                                    # (32, 128)
    b1r = b1.reshape(1, hidden).astype(jnp.float32)
    b2r = b2.reshape(1, hidden).astype(jnp.float32)
    b3r = jnp.zeros((1, LANE), jnp.float32).at[:, :act_dim].set(
        b3.reshape(1, act_dim).astype(jnp.float32))

    # --- batch tiling ----------------------------------------------------------
    tb = min(block_b, _round_up(batch, 8))          # tile rows, multiple of 8
    padded_b = _round_up(batch, tb)
    if padded_b != batch:
        x = jnp.pad(x, ((0, padded_b - batch), (0, 0)))
    grid = (padded_b // tb,)

    x_map = lambda i: (i, 0)
    const_map = lambda i: (0, 0)    # weights/biases: DMA'd once, VMEM-resident

    cost = pl.CostEstimate(
        flops=2 * padded_b * (state_dim * hidden + hidden * hidden + hidden * LANE),
        transcendentals=padded_b * LANE,
        bytes_accessed=(padded_b * state_dim + padded_b * LANE) * 4
        + (w1t.size + w2t.size + w3t.size) * 2
        + (b1r.size + b2r.size + b3r.size) * 4,
    )

    out = pl.pallas_call(
        actor_kernel,
        out_shape=jax.ShapeDtypeStruct((padded_b, LANE), jnp.float32),
        grid=grid,
        in_specs=[
            pl.BlockSpec((tb, state_dim), x_map),       # x tile
            pl.BlockSpec((state_dim, hidden), const_map),
            pl.BlockSpec((1, hidden), const_map),
            pl.BlockSpec((hidden, hidden), const_map),
            pl.BlockSpec((1, hidden), const_map),
            pl.BlockSpec((hidden, LANE), const_map),
            pl.BlockSpec((1, LANE), const_map),
        ],
        out_specs=pl.BlockSpec((tb, LANE), x_map),      # lane-dense output slab
        compiler_params=pltpu.CompilerParams(
            dimension_semantics=("parallel",)),          # megacore-shard the batch axis
        cost_estimate=cost,
    )(x, w1t, b1r, w2t, b2r, w3t, b3r)

    return out[:batch, :act_dim]


def init_params(key, state_dim=16, hidden=32, act_dim=4):
    """Deterministic init mirroring the torch module (torch layouts).

    fanin_init: bound = 1/sqrt(weight.size(0)) = 1/sqrt(out_features);
    final layer weights: uniform(-0.003, 0.003);
    biases keep the torch.nn.Linear default uniform(-1/sqrt(in_features), ...).
    """
    ks = jax.random.split(key, 6)

    def u(k, shape, bound):
        return jax.random.uniform(k, shape, jnp.float32, -bound, bound)

    w1 = u(ks[0], (hidden, state_dim), 1.0 / jnp.sqrt(hidden))    # fanin init
    b1 = u(ks[1], (hidden,), 1.0 / jnp.sqrt(state_dim))           # torch default bias
    w2 = u(ks[2], (hidden, hidden), 1.0 / jnp.sqrt(hidden))       # fanin init
    b2 = u(ks[3], (hidden,), 1.0 / jnp.sqrt(hidden))
    w3 = u(ks[4], (act_dim, hidden), 0.003)                       # 'uniform' init
    b3 = u(ks[5], (act_dim,), 1.0 / jnp.sqrt(hidden))             # torch default bias
    return (w1, b1, w2, b2, w3, b3)


def actor_reference(x, params):
    """Pure-JAX fp32 reference of the same forward pass."""
    w1, b1, w2, b2, w3, b3 = params
    h = _leaky_relu(x @ w1.T + b1[None, :])
    h = _leaky_relu(h @ w2.T + b2[None, :])
    return jnp.tanh(h @ w3.T + b3[None, :])


if __name__ == "__main__":
    key = jax.random.PRNGKey(0)
    k_params, k_x1, k_x2 = jax.random.split(key, 3)

    batch, state_dim, hidden, act_dim = 2, 16, 32, 4
    params = init_params(k_params, state_dim, hidden, act_dim)

    # Small demo batch (module-consistent shapes).
    x_small = jax.random.normal(k_x1, (batch, state_dim), jnp.float32)
    out_small = jax.block_until_ready(actor_forward(x_small, params))
    ref_small = actor_reference(x_small, params)
    assert out_small.shape == (batch, act_dim)
    # bf16 MXU inputs vs fp32 reference -> loosened tolerance.
    assert jnp.allclose(out_small, ref_small, atol=2e-2, rtol=0.0)

    # Larger batch exercising the grid (multiple tiles + padding path).
    big = 1024 + 3
    x_big = jax.random.normal(k_x2, (big, state_dim), jnp.float32)
    out_big = jax.block_until_ready(actor_forward(x_big, params))
    ref_big = actor_reference(x_big, params)
    assert out_big.shape == (big, act_dim)
    assert jnp.allclose(out_big, ref_big, atol=2e-2, rtol=0.0)

    print("KERNEL_OK")
</pallas_src>

<mosaic_0001>
module attributes {stable_mosaic.version = 11 : i64} {
  func.func @actor_kernel(%arg0: i32, %arg1: memref<8x16xf32, #tpu.memory_space<vmem>>, %arg2: memref<16x32xbf16, #tpu.memory_space<vmem>>, %arg3: memref<1x32xf32, #tpu.memory_space<vmem>>, %arg4: memref<32x32xbf16, #tpu.memory_space<vmem>>, %arg5: memref<1x32xf32, #tpu.memory_space<vmem>>, %arg6: memref<32x128xbf16, #tpu.memory_space<vmem>>, %arg7: memref<1x128xf32, #tpu.memory_space<vmem>>, %arg8: memref<8x128xf32, #tpu.memory_space<vmem>>) attributes {dimension_semantics = [#tpu.dimension_semantics<parallel>], iteration_bounds = array<i64: 1>, scalar_prefetch = 0 : i64, scratch_operands = 0 : i64, tpu.core_type = #tpu.core_type<tc>, window_params = [{transform_indices = @transform_0, window_bounds = array<i64: 8, 16>}, {pipeline_mode = #tpu.pipeline_mode<synchronous>, transform_indices = @transform_1, window_bounds = array<i64: 16, 32>}, {pipeline_mode = #tpu.pipeline_mode<synchronous>, transform_indices = @transform_2, window_bounds = array<i64: 1, 32>}, {pipeline_mode = #tpu.pipeline_mode<synchronous>, transform_indices = @transform_3, window_bounds = array<i64: 32, 32>}, {pipeline_mode = #tpu.pipeline_mode<synchronous>, transform_indices = @transform_4, window_bounds = array<i64: 1, 32>}, {pipeline_mode = #tpu.pipeline_mode<synchronous>, transform_indices = @transform_5, window_bounds = array<i64: 32, 128>}, {pipeline_mode = #tpu.pipeline_mode<synchronous>, transform_indices = @transform_6, window_bounds = array<i64: 1, 128>}, {transform_indices = @transform_7, window_bounds = array<i64: 8, 128>}]} {
    %c0 = arith.constant 0 : index
    %c0_0 = arith.constant 0 : index
    %0 = vector.load %arg1[%c0, %c0_0] : memref<8x16xf32, #tpu.memory_space<vmem>>, vector<8x16xf32>
    %1 = arith.truncf %0 : vector<8x16xf32> to vector<8x16xbf16>
    %c0_1 = arith.constant 0 : index
    %c0_2 = arith.constant 0 : index
    %2 = vector.load %arg2[%c0_1, %c0_2] : memref<16x32xbf16, #tpu.memory_space<vmem>>, vector<16x32xbf16>
    %cst = arith.constant dense<0.000000e+00> : vector<8x32xf32>
    %3 = tpu.matmul %1, %2, %cst {dimension_numbers = #tpu.dot_dimension_numbers<[1], [0], [0], [1], [0, 0, 1, 1], [], []>} : vector<8x16xbf16>, vector<16x32xbf16>, vector<8x32xf32> -> vector<8x32xf32>
    %c0_3 = arith.constant 0 : index
    %c0_4 = arith.constant 0 : index
    %4 = vector.load %arg3[%c0_3, %c0_4] : memref<1x32xf32, #tpu.memory_space<vmem>>, vector<1x32xf32>
    %5 = vector.broadcast %4 : vector<1x32xf32> to vector<8x32xf32>
    %6 = arith.addf %3, %5 : vector<8x32xf32>
    %cst_5 = arith.constant 0.000000e+00 : f32
    %7 = vector.broadcast %cst_5 : f32 to vector<8x32xf32>
    %8 = arith.cmpf ogt, %6, %7 : vector<8x32xf32>
    %cst_6 = arith.constant 0.00999999977 : f32
    %9 = vector.broadcast %cst_6 : f32 to vector<8x32xf32>
    %10 = arith.mulf %9, %6 : vector<8x32xf32>
    %11 = arith.select %8, %6, %10 : vector<8x32xi1>, vector<8x32xf32>
    %12 = arith.truncf %11 : vector<8x32xf32> to vector<8x32xbf16>
    %c0_7 = arith.constant 0 : index
    %c0_8 = arith.constant 0 : index
    %13 = vector.load %arg4[%c0_7, %c0_8] : memref<32x32xbf16, #tpu.memory_space<vmem>>, vector<32x32xbf16>
    %cst_9 = arith.constant dense<0.000000e+00> : vector<8x32xf32>
    %14 = tpu.matmul %12, %13, %cst_9 {dimension_numbers = #tpu.dot_dimension_numbers<[1], [0], [0], [1], [0, 0, 1, 1], [], []>} : vector<8x32xbf16>, vector<32x32xbf16>, vector<8x32xf32> -> vector<8x32xf32>
    %c0_10 = arith.constant 0 : index
    %c0_11 = arith.constant 0 : index
    %15 = vector.load %arg5[%c0_10, %c0_11] : memref<1x32xf32, #tpu.memory_space<vmem>>, vector<1x32xf32>
    %16 = vector.broadcast %15 : vector<1x32xf32> to vector<8x32xf32>
    %17 = arith.addf %14, %16 : vector<8x32xf32>
    %cst_12 = arith.constant 0.000000e+00 : f32
    %18 = vector.broadcast %cst_12 : f32 to vector<8x32xf32>
    %19 = arith.cmpf ogt, %17, %18 : vector<8x32xf32>
    %cst_13 = arith.constant 0.00999999977 : f32
    %20 = vector.broadcast %cst_13 : f32 to vector<8x32xf32>
    %21 = arith.mulf %20, %17 : vector<8x32xf32>
    %22 = arith.select %19, %17, %21 : vector<8x32xi1>, vector<8x32xf32>
    %23 = arith.truncf %22 : vector<8x32xf32> to vector<8x32xbf16>
    %c0_14 = arith.constant 0 : index
    %c0_15 = arith.constant 0 : index
    %24 = vector.load %arg6[%c0_14, %c0_15] : memref<32x128xbf16, #tpu.memory_space<vmem>>, vector<32x128xbf16>
    %cst_16 = arith.constant dense<0.000000e+00> : vector<8x128xf32>
    %25 = tpu.matmul %23, %24, %cst_16 {dimension_numbers = #tpu.dot_dimension_numbers<[1], [0], [0], [1], [0, 0, 1, 1], [], []>} : vector<8x32xbf16>, vector<32x128xbf16>, vector<8x128xf32> -> vector<8x128xf32>
    %c0_17 = arith.constant 0 : index
    %c0_18 = arith.constant 0 : index
    %26 = vector.load %arg7[%c0_17, %c0_18] : memref<1x128xf32, #tpu.memory_space<vmem>>, vector<1x128xf32>
    %27 = vector.broadcast %26 : vector<1x128xf32> to vector<8x128xf32>
    %28 = arith.addf %25, %27 : vector<8x128xf32>
    %29 = math.tanh %28 : vector<8x128xf32>
    %c0_19 = arith.constant 0 : index
    %c0_20 = arith.constant 0 : index
    %30 = vector.load %arg8[%c0_19, %c0_20] : memref<8x128xf32, #tpu.memory_space<vmem>>, vector<8x128xf32>
    tpu.vector_store %arg8[%c0_19, %c0_20], %29 {strides = array<i32>} : memref<8x128xf32, #tpu.memory_space<vmem>>, vector<8x128xf32>,
    return
  }
  func.func @transform_0(%arg0: i32) -> (i32, i32) {
    %c0_i32 = arith.constant 0 : i32
    %c0_i32_0 = arith.constant 0 : i32
    return %arg0, %c0_i32 : i32, i32
  }
  func.func @transform_1(%arg0: i32) -> (i32, i32) {
    %c0_i32 = arith.constant 0 : i32
    %c0_i32_0 = arith.constant 0 : i32
    %c0_i32_1 = arith.constant 0 : i32
    return %c0_i32, %c0_i32_0 : i32, i32
  }
  func.func @transform_2(%arg0: i32) -> (i32, i32) {
    %c0_i32 = arith.constant 0 : i32
    %c0_i32_0 = arith.constant 0 : i32
    %c0_i32_1 = arith.constant 0 : i32
    return %c0_i32, %c0_i32_0 : i32, i32
  }
  func.func @transform_3(%arg0: i32) -> (i32, i32) {
    %c0_i32 = arith.constant 0 : i32
    %c0_i32_0 = arith.constant 0 : i32
    %c0_i32_1 = arith.constant 0 : i32
    return %c0_i32, %c0_i32_0 : i32, i32
  }
  func.func @transform_4(%arg0: i32) -> (i32, i32) {
    %c0_i32 = arith.constant 0 : i32
    %c0_i32_0 = arith.constant 0 : i32
    %c0_i32_1 = arith.constant 0 : i32
    return %c0_i32, %c0_i32_0 : i32, i32
  }
  func.func @transform_5(%arg0: i32) -> (i32, i32) {
    %c0_i32 = arith.constant 0 : i32
    %c0_i32_0 = arith.constant 0 : i32
    %c0_i32_1 = arith.constant 0 : i32
    return %c0_i32, %c0_i32_0 : i32, i32
  }
  func.func @transform_6(%arg0: i32) -> (i32, i32) {
    %c0_i32 = arith.constant 0 : i32
    %c0_i32_0 = arith.constant 0 : i32
    %c0_i32_1 = arith.constant 0 : i32
    return %c0_i32, %c0_i32_0 : i32, i32
  }
  func.func @transform_7(%arg0: i32) -> (i32, i32) {
    %c0_i32 = arith.constant 0 : i32
    %c0_i32_0 = arith.constant 0 : i32
    return %arg0, %c0_i32 : i32, i32
  }
}

</mosaic_0001>

<llo_original>
// kernel: tpu_custom_call.1
$region0: #{tpu_custom_call.1}
  #allocation0 [shape = 'u32[]', space=smem, size = 0x4, offset = 0x4, fixed_abs, tag = 'smem constant byte address 0x4 - core index']
  #allocation1 [shape = 'u32[72,128]{1,0:T(1,128)}', space=vmem, size = 0x9000, scoped, tag = 'internal scratch']
  %s0 = inlined_call_operand.hbm [shape: f32[8,16], index: 0, kind: input, shape index: {}]
  %s1 = inlined_call_operand.hbm [shape: bf16[16,32], index: 1, kind: input, shape index: {}]
  %s2 = inlined_call_operand.vmem [shape: f32[1,32], index: 2, kind: input, shape index: {}]
  %s3 = inlined_call_operand.hbm [shape: bf16[32,32], index: 3, kind: input, shape index: {}]
  %s4 = inlined_call_operand.vmem [shape: f32[1,32], index: 4, kind: input, shape index: {}]
  %s5 = inlined_call_operand.hbm [shape: bf16[32,128], index: 5, kind: input, shape index: {}]
  %s6 = inlined_call_operand.vmem [shape: f32[1,128], index: 6, kind: input, shape index: {}]
  %s7 = inlined_call_operand.hbm [shape: f32[8,128], index: 7, kind: output, shape index: {}]
  %s8 = sld [smem:[#allocation0]]
  $region54: #{tpu_custom_call.1} parent=0
    _
  %s10 = ssub.s32 1, %s8
  %s11 = scalar_select 0, %s10, %s8
  $region1: #{tpu_custom_call.1} parent=0
    #allocation2 [shape = 'u8[4096]{0}', space=vmem, size = 0x1000, scoped, tag = 'input window, operand 0, single buffered']
    #allocation3 [shape = 's32[1]{0}', space=sflag, size = 0x4, scoped, tag = 'scoped memory for tpu_custom_call.1']
    #allocation4 [shape = 's32[1]{0}', space=sflag, size = 0x4, scoped, tag = 'scoped memory for tpu_custom_call.1']
    #allocation5 [shape = 'u8[4096]{0}', space=vmem, size = 0x1000, scoped, tag = 'input window, operand 1, single buffered']
    #allocation6 [shape = 's32[1]{0}', space=sflag, size = 0x4, scoped, tag = 'scoped memory for tpu_custom_call.1']
    #allocation7 [shape = 'u8[8192]{0}', space=vmem, size = 0x2000, scoped, tag = 'input window, operand 3, single buffered']
    #allocation8 [shape = 'u8[8192]{0}', space=vmem, size = 0x2000, scoped, tag = 'input window, operand 5, single buffered']
    #allocation9 [shape = 's32[1]{0}', space=sflag, size = 0x4, scoped, tag = 'scoped memory for tpu_custom_call.1']
    #allocation10 [shape = 'u8[4096]{0}', space=vmem, size = 0x1000, scoped, tag = 'output window, operand 0, single buffered']
    %12 = vsyncpa [#allocation3], 0
    %13 = vsyncpa [#allocation6], 0
    %14 = vsyncpa [#allocation9], 0
    %15 = vsyncpa [#allocation4], 0
    // Predicated region
    $region2: #{tpu_custom_call.1} parent=1 // pred_check
      _
    $region3: #{tpu_custom_call.1} parent=1 // pred_check_branch
      %17 = sbr.rel (0) target = $region5
    $region4: #{tpu_custom_call.1} parent=1 // pred_region
      %19 = vsyncadd [#allocation3], 0
      %s21 = sshll.u32 %s0, 4
      %s22 = int_to_ptr.hbm [resolvable:$true] %s21
      %s23 = sshll.u32 [#allocation2], 4
      %s24 = int_to_ptr.vmem [resolvable:$true] %s23
      %26 = dma.hbm_to_vmem [thread:$0]  %s22, 128, %s24, [#allocation3]
    $region5: #{tpu_custom_call.1} parent=1 // pred_fallthru
      _
    // Predicated region
    $region6: #{tpu_custom_call.1} parent=1 // pred_check
      _
    $region7: #{tpu_custom_call.1} parent=1 // pred_check_branch
      %28 = sbr.rel (0) target = $region9
    $region8: #{tpu_custom_call.1} parent=1 // pred_region
      %30 = vsyncadd [#allocation6], 0
      %s31 = sshll.u32 %s1, 4
      %s32 = int_to_ptr.hbm [resolvable:$true] %s31
      %s33 = sshll.u32 [#allocation5], 4
      %s34 = int_to_ptr.vmem [resolvable:$true] %s33
      %39 = dma.hbm_to_vmem [thread:$0]  %s32, 128, %s34, [#allocation6], 64, 64, 4
    $region9: #{tpu_custom_call.1} parent=1 // pred_fallthru
      _
    // Predicated region
    $region10: #{tpu_custom_call.1} parent=1 // pred_check
      _
    $region11: #{tpu_custom_call.1} parent=1 // pred_check_branch
      %41 = sbr.rel (0) target = $region13
    $region12: #{tpu_custom_call.1} parent=1 // pred_region
      _
    $region13: #{tpu_custom_call.1} parent=1 // pred_fallthru
      _
    // Predicated region
    $region14: #{tpu_custom_call.1} parent=1 // pred_check
      _
    $region15: #{tpu_custom_call.1} parent=1 // pred_check_branch
      %43 = sbr.rel (0) target = $region17
    $region16: #{tpu_custom_call.1} parent=1 // pred_region
      %45 = vsyncadd [#allocation6], 0
      %s46 = sshll.u32 %s3, 4
      %s47 = int_to_ptr.hbm [resolvable:$true] %s46
      %s48 = sshll.u32 [#allocation7], 4
      %s49 = int_to_ptr.vmem [resolvable:$true] %s48
      %54 = dma.hbm_to_vmem [thread:$0]  %s47, 256, %s49, [#allocation6], 64, 64, 4
    $region17: #{tpu_custom_call.1} parent=1 // pred_fallthru
      _
    // Predicated region
    $region18: #{tpu_custom_call.1} parent=1 // pred_check
      _
    $region19: #{tpu_custom_call.1} parent=1 // pred_check_branch
      %56 = sbr.rel (0) target = $region21
    $region20: #{tpu_custom_call.1} parent=1 // pred_region
      _
    $region21: #{tpu_custom_call.1} parent=1 // pred_fallthru
      _
    // Predicated region
    $region22: #{tpu_custom_call.1} parent=1 // pred_check
      _
    $region23: #{tpu_custom_call.1} parent=1 // pred_check_branch
      %58 = sbr.rel (0) target = $region25
    $region24: #{tpu_custom_call.1} parent=1 // pred_region
      %60 = vsyncadd [#allocation9], 0
      %s61 = sshll.u32 %s5, 4
      %s62 = int_to_ptr.hbm [resolvable:$true] %s61
      %s63 = sshll.u32 [#allocation8], 4
      %s64 = int_to_ptr.vmem [resolvable:$true] %s63
      %69 = dma.hbm_to_vmem [thread:$0]  %s62, 256, %s64, [#allocation9], 64, 64, 4
    $region25: #{tpu_custom_call.1} parent=1 // pred_fallthru
      _
    // Predicated region
    $region26: #{tpu_custom_call.1} parent=1 // pred_check
      _
    $region27: #{tpu_custom_call.1} parent=1 // pred_check_branch
      %71 = sbr.rel (0) target = $region29
    $region28: #{tpu_custom_call.1} parent=1 // pred_region
      _
    $region29: #{tpu_custom_call.1} parent=1 // pred_fallthru
      _
    // Predicated region
    $region30: #{tpu_custom_call.1} parent=1 // pred_check
      _
    $region31: #{tpu_custom_call.1} parent=1 // pred_check_branch
      %73 = sbr.rel (0) target = $region33
    $region32: #{tpu_custom_call.1} parent=1 // pred_region
      %75 = dma.done [#allocation3], 128
    $region33: #{tpu_custom_call.1} parent=1 // pred_fallthru
      _
    // Predicated region
    $region34: #{tpu_custom_call.1} parent=1 // pred_check
      _
    $region35: #{tpu_custom_call.1} parent=1 // pred_check_branch
      %77 = sbr.rel (0) target = $region37
    $region36: #{tpu_custom_call.1} parent=1 // pred_region
      %79 = dma.done [#allocation6], 128
    $region37: #{tpu_custom_call.1} parent=1 // pred_fallthru
      _
    // Predicated region
    $region38: #{tpu_custom_call.1} parent=1 // pred_check
      _
    $region39: #{tpu_custom_call.1} parent=1 // pred_check_branch
      %81 = sbr.rel (0) target = $region41
    $region40: #{tpu_custom_call.1} parent=1 // pred_region
      %83 = dma.done [#allocation6], 256
    $region41: #{tpu_custom_call.1} parent=1 // pred_fallthru
      _
    // Predicated region
    $region42: #{tpu_custom_call.1} parent=1 // pred_check
      _
    $region43: #{tpu_custom_call.1} parent=1 // pred_check_branch
      %85 = sbr.rel (0) target = $region45
    $region44: #{tpu_custom_call.1} parent=1 // pred_region
      %87 = dma.done [#allocation9], 256
    $region45: #{tpu_custom_call.1} parent=1 // pred_fallthru
      _
    %v89 = vld [vmem:[#allocation2] sm:$0xff]
    %v90 = vpack.c.bf16 %v89, %v89
    %v91 = vld [vmem:[#allocation5] sm:$0xf]
    %v92 = vld [vmem:[#allocation5 + $0x4] sm:$0xf]
    %v93 = vld [vmem:[%s2] sm:$0x1]
    %v95 = vperm.slane %v93, 0
    %v99 = vunpack.c.l.b16 %v91
    %v100 = vunpack.c.l.b16 %v92
    %v101 = vpack.c.b16 %v100, %v99
    %vm103 = vcmask 130048
    %v105 = vsel %vm103, %v90, 0
    %107 = vmatpush.bf16.msra.mxu0 0
    %108 = vmatpush.bf16.msra.mxu0 0
    %109 = vmatpush.bf16.msra.mxu0 0
    %110 = vmatpush.bf16.msra.mxu0 0
    %111 = vmatpush.bf16.msra.mxu0 0
    %112 = vmatpush.bf16.msra.mxu0 0
    %113 = vmatpush.bf16.msra.mxu0 0
    %114 = vmatpush.bf16.msra.mxu0 %v101
    %115 = vmatmul.bf16.gmra.mxu0 %v105
    %v116 = vpop.f32.mrf.mxu0
    %v117 = vadd.f32 %v95, %v116
    %v118 = vpop.f32.mrf.mxu0
    %119 = vdwg.mxu0
    %vm120 = vcmp.gt.f32.partialorder %v117, 0.0
    %v121 = vmul.f32 %v117, 0.01
    %v122 = vsel %vm120, %v117, %v121
    %v123 = vpack.c.bf16 %v122, %v122
    %v124 = vld [vmem:[#allocation7] sm:$0xf]
    %v125 = vld [vmem:[#allocation7 + $0x4] sm:$0xf]
    %v126 = vld [vmem:[#allocation7 + $0x8] sm:$0xf]
    %v127 = vld [vmem:[#allocation7 + $0xc] sm:$0xf]
    %v128 = vld [vmem:[%s4] sm:$0x1]
    %v130 = vperm.slane %v128, 0
    %v136 = vunpack.c.l.b16 %v124
    %v137 = vunpack.c.l.b16 %v125
    %v138 = vunpack.c.l.b16 %v126
    %v139 = vunpack.c.l.b16 %v127
    %v140 = vpack.c.b16 %v137, %v136
    %v141 = vpack.c.b16 %v139, %v138
    %vm144 = vcmask 261120
    %v146 = vsel %vm144, %v123, 0
    %148 = vmatpush.bf16.msra.mxu0 0
    %149 = vmatpush.bf16.msra.mxu0 0
    %150 = vmatpush.bf16.msra.mxu0 0
    %151 = vmatpush.bf16.msra.mxu0 0
    %152 = vmatpush.bf16.msra.mxu0 0
    %153 = vmatpush.bf16.msra.mxu0 0
    %154 = vmatpush.bf16.msra.mxu0 %v141
    %155 = vmatpush.bf16.msra.mxu0 %v140
    %156 = vmatmul.bf16.gmra.mxu0 %v146
    %v157 = vpop.f32.mrf.mxu0
    %v158 = vadd.f32 %v130, %v157
    %v159 = vpop.f32.mrf.mxu0
    %160 = vdwg.mxu0
    %vm161 = vcmp.gt.f32.partialorder %v158, 0.0
    %v162 = vmul.f32 %v158, 0.01
    %v163 = vsel %vm161, %v158, %v162
    %v164 = vpack.c.bf16 %v163, %v163
    %v165 = vld [vmem:[#allocation8] sm:$0xf]
    %v166 = vld [vmem:[#allocation8 + $0x4] sm:$0xf]
    %v167 = vld [vmem:[#allocation8 + $0x8] sm:$0xf]
    %v168 = vld [vmem:[#allocation8 + $0xc] sm:$0xf]
    %v169 = vld [vmem:[%s6] sm:$0x1]
    %v171 = vperm.slane %v169, 0
    %v177 = vunpack.c.l.b16 %v165
    %v178 = vunpack.c.l.b16 %v166
    %v179 = vunpack.c.l.b16 %v167
    %v180 = vunpack.c.l.b16 %v168
    %v181 = vpack.c.b16 %v178, %v177
    %v182 = vpack.c.b16 %v180, %v179
    %v186 = vsel %vm144, %v164, 0
    %188 = vmatpush.bf16.msra.mxu0 0
    %189 = vmatpush.bf16.msra.mxu0 0
    %190 = vmatpush.bf16.msra.mxu0 0
    %191 = vmatpush.bf16.msra.mxu0 0
    %192 = vmatpush.bf16.msra.mxu0 0
    %193 = vmatpush.bf16.msra.mxu0 0
    %194 = vmatpush.bf16.msra.mxu0 %v182
    %195 = vmatpush.bf16.msra.mxu0 %v181
    %196 = vmatmul.bf16.gmra.mxu0 %v186
    %v197 = vpop.f32.mrf.mxu0
    %v198 = vadd.f32 %v171, %v197
    %v199 = vpop.f32.mrf.mxu0
    %200 = vdwg.mxu0
    %v201 = vtanh.pop %v198
    %202 = vst [vmem:[#allocation10] sm:$0xff] %v201
    // Predicated region
    $region46: #{tpu_custom_call.1} parent=1 // pred_check
      _
    $region47: #{tpu_custom_call.1} parent=1 // pred_check_branch
      %204 = sbr.rel (0) target = $region49
    $region48: #{tpu_custom_call.1} parent=1 // pred_region
      %206 = vsyncadd [#allocation4], 0
      %s208 = sshll.u32 [#allocation10], 4
      %s209 = int_to_ptr.vmem [resolvable:$true] %s208
      %s210 = sshll.u32 %s7, 4
      %s211 = int_to_ptr.hbm [resolvable:$true] %s210
      %213 = dma.vmem_to_hbm [thread:$0]  %s209, 128, %s211, [#allocation4]
    $region49: #{tpu_custom_call.1} parent=1 // pred_fallthru
      _
    // Predicated region
    $region50: #{tpu_custom_call.1} parent=1 // pred_check
      _
    $region51: #{tpu_custom_call.1} parent=1 // pred_check_branch
      %215 = sbr.rel (0) target = $region53
    $region52: #{tpu_custom_call.1} parent=1 // pred_region
      %217 = dma.done [#allocation4], 128
    $region53: #{tpu_custom_call.1} parent=1 // pred_fallthru
      _
    %218 = vsyncpa [#allocation3], 1
    %219 = vsyncpa [#allocation6], 1
    %220 = vsyncpa [#allocation9], 1
    %221 = vsyncpa [#allocation4], 1

</llo_original>
